<compile_context>
chip_gen: v5e
topology: v5e:2x2
jax: 0.10.0
libtpu: 0.0.40
codegen_flags: <defaults>
</compile_context>

<pallas_src>
import functools

import jax
import jax.numpy as jnp
from jax.experimental import pallas as pl
from jax.experimental.pallas import tpu as pltpu


def _round_up(n, m):
    return ((n + m - 1) // m) * m


def _default_act_dtype():
    """bf16 activations on v6e/v7x (bf16 VPU/EUP); f32 on v5e and older."""
    try:
        kind = jax.devices()[0].device_kind.lower()
    except Exception:
        return jnp.float32
    for old in ("v2", "v3", "v4", "v5"):
        if old in kind:
            return jnp.float32
    return jnp.bfloat16


def _choose_tile_b(B, D, act_bytes):
    """Pick the batch tile from a VMEM budget (counts the (256, tb)
    intermediates + the double-buffered f32 x tile), capped at 4096."""
    per_col = 256 * (4 + 2 * act_bytes) + 2 * D * 4
    budget = 24 * 1024 * 1024                      # leaves headroom on v7x 64 MiB
    cap = max(128, min(4096, budget // per_col))
    tb = min(cap, _round_up(B, 8))
    # Keep at least two grid tiles for big batches so v7x megacore splits work.
    if B > 256 and pl.cdiv(B, tb) < 2:
        tb = pl.cdiv(B, 2)
    return max(8, _round_up(tb, 8))


def network_kernel(x_ref, w1_ref, b1_ref, w2_ref, b2_ref, o_ref, *,
                   act_dtype, matmul_dtype):
    # ---- hidden linear on the MXU, batch on the lane axis -------------------
    # h[h, b] = sum_d w1[h, d] * x[b, d]  -> (H, TB), f32 accumulation.
    # x / w1 are cast to the MXU dtype here (no extra wrapper HBM pass).
    x = x_ref[...].astype(matmul_dtype)
    w1 = w1_ref[...].astype(matmul_dtype)
    h = jax.lax.dot_general(
        w1, x,
        dimension_numbers=(((1,), (1,)), ((), ())),
        preferred_element_type=jnp.float32,
    )
    h = h + b1_ref[...]                               # (H, 1) broadcasts over lanes

    # ---- sigmoid: single EUP transcendental ----------------------------------
    # sigmoid(x) == 0.5 * tanh(0.5 * x) + 0.5 ; runs in bf16 on v6e/v7x.
    half = jnp.asarray(0.5, act_dtype)
    s = jnp.tanh(h.astype(act_dtype) * half) * half + half      # (H, TB)

    # ---- output linear (256 -> 1) on the (otherwise idle) MXU -----------------
    # (1, H) x (H, TB) -> (1, TB): avoids a 256-deep sublane reduction on the
    # VALU/XLU and the result lands lane-dense.
    w2 = w2_ref[...].astype(act_dtype)                # (1, H)
    logits = jax.lax.dot_general(
        w2, s,
        dimension_numbers=(((1,), (0,)), ((), ())),
        preferred_element_type=jnp.float32,
    ) + b2_ref[0]                                     # (1, TB) f32

    # ---- softmax over the output-feature axis (size 1) -----------------------
    # Kept for exact PyTorch semantics; identically 1.0 for finite logits.
    m = jnp.max(logits, axis=0, keepdims=True)
    e = jnp.exp(logits - m)
    p = e / jnp.sum(e, axis=0, keepdims=True)

    o_ref[...] = p.reshape(o_ref.shape).astype(o_ref.dtype)


def network_forward(x, w1, b1, w2, b2, *, tile_b=None,
                    matmul_dtype=jnp.bfloat16, act_dtype=None):
    """Forward pass of `Network`.

    x : (B, D) float32
    w1: (H, D) float32   -- nn.Linear(input_size, hidden) weight (out, in)
    b1: (H,)   float32
    w2: (1, H) float32   -- nn.Linear(256, 1) weight; H must be 256
    b2: (1,)   float32
    returns (B, 1) float32
    """
    B, D = x.shape
    H, D2 = w1.shape
    assert D2 == D, "w1 must be (hidden, input_size)"
    assert w2.shape == (1, H) and H == 256, "output layer expects 256 inputs"

    if act_dtype is None:
        act_dtype = _default_act_dtype()
    act_bytes = jnp.dtype(act_dtype).itemsize

    if tile_b is None:
        tb = _choose_tile_b(B, D, act_bytes)
    else:
        tb = max(8, _round_up(min(int(tile_b), _round_up(B, 8)), 8))
    num_tiles = pl.cdiv(B, tb)                 # ragged last tile -> partial block

    # Tiny, resident operands (a few KiB): reshape/cast cost is negligible.
    b1_col = b1.reshape(H, 1).astype(jnp.float32)
    w2_row = w2.reshape(1, H).astype(jnp.float32)
    b2_s = b2.reshape(1).astype(jnp.float32)

    kernel = functools.partial(network_kernel,
                               act_dtype=act_dtype, matmul_dtype=matmul_dtype)

    out = pl.pallas_call(
        kernel,
        out_shape=jax.ShapeDtypeStruct((num_tiles, 1, tb), jnp.float32),
        grid=(num_tiles,),
        in_specs=[
            pl.BlockSpec((tb, D), lambda i: (i, 0)),            # x: batch-tiled stream
            pl.BlockSpec((H, D), lambda i: (0, 0)),             # w1: resident
            pl.BlockSpec((H, 1), lambda i: (0, 0)),             # b1 column
            pl.BlockSpec((1, H), lambda i: (0, 0)),             # w2 row
            pl.BlockSpec(memory_space=pltpu.MemorySpace.SMEM),  # b2 scalar
        ],
        out_specs=pl.BlockSpec((1, 1, tb), lambda i: (i, 0, 0)),  # lane-dense rows
        compiler_params=pltpu.CompilerParams(
            dimension_semantics=("parallel",),       # shard batch tiles across TCs
            vmem_limit_bytes=48 * 1024 * 1024,       # fits v7x's 64 MiB physical
        ),
    )(x, w1, b1_col, w2_row, b2_s)

    # (num_tiles, 1, tb) lane-dense slab -> (B, 1). Rows past B (partial last
    # tile) carry garbage from out-of-bounds x columns and are sliced off here.
    return out.reshape(num_tiles * tb, 1)[:B]


def init_params(key, input_size, hidden_layer):
    """Deterministic init mirroring nn.Linear's U(-1/sqrt(fan_in), 1/sqrt(fan_in)),
    in native PyTorch layouts: w (out, in), b (out,)."""
    k1, k2, k3, k4 = jax.random.split(key, 4)
    bound1 = 1.0 / jnp.sqrt(jnp.float32(input_size))
    bound2 = 1.0 / jnp.sqrt(jnp.float32(256))
    w1 = jax.random.uniform(k1, (hidden_layer, input_size), jnp.float32,
                            minval=-bound1, maxval=bound1)
    b1 = jax.random.uniform(k2, (hidden_layer,), jnp.float32,
                            minval=-bound1, maxval=bound1)
    w2 = jax.random.uniform(k3, (1, 256), jnp.float32,
                            minval=-bound2, maxval=bound2)
    b2 = jax.random.uniform(k4, (1,), jnp.float32,
                            minval=-bound2, maxval=bound2)
    return w1, b1, w2, b2


if __name__ == "__main__":
    # Forward pass only works when hidden_layer == 256 (output expects 256 in).
    batch = 8
    input_size = 32
    hidden_layer = 256

    key = jax.random.PRNGKey(0)
    kx, kp = jax.random.split(key)
    x = jax.random.normal(kx, (batch, input_size), jnp.float32)
    w1, b1, w2, b2 = init_params(kp, input_size, hidden_layer)

    out = network_forward(x, w1, b1, w2, b2)
    out = jax.block_until_ready(out)

    # Pure-JAX f32 reference of the same semantics.
    h = x @ w1.T + b1
    s = jax.nn.sigmoid(h)
    logits = s @ w2.T + b2
    ref = jax.nn.softmax(logits, axis=1)          # (B, 1) -> identically 1.0
    assert out.shape == (batch, 1)
    assert jnp.allclose(out, ref, atol=1e-5), "mismatch vs reference"

    # Exercise the gridded path with a ragged (partial) last batch tile.
    batch2 = 40
    x2 = jax.random.normal(kx, (batch2, input_size), jnp.float32)
    out2 = jax.block_until_ready(
        network_forward(x2, w1, b1, w2, b2, tile_b=16))
    assert out2.shape == (batch2, 1)
    assert jnp.allclose(out2, 1.0, atol=1e-5), "multi-tile mismatch"

    print("KERNEL_OK")
</pallas_src>

<mosaic_0001>
module attributes {stable_mosaic.version = 11 : i64} {
  func.func @network_kernel(%arg0: i32, %arg1: memref<8x32xf32, #tpu.memory_space<vmem>>, %arg2: memref<256x32xf32, #tpu.memory_space<vmem>>, %arg3: memref<256x1xf32, #tpu.memory_space<vmem>>, %arg4: memref<1x256xf32, #tpu.memory_space<vmem>>, %arg5: memref<1xf32, #tpu.memory_space<smem>>, %arg6: memref<1x1x8xf32, #tpu.memory_space<vmem>>) attributes {dimension_semantics = [#tpu.dimension_semantics<parallel>], iteration_bounds = array<i64: 1>, scalar_prefetch = 0 : i64, scratch_operands = 0 : i64, tpu.core_type = #tpu.core_type<tc>, window_params = [{transform_indices = @transform_0, window_bounds = array<i64: 8, 32>}, {pipeline_mode = #tpu.pipeline_mode<synchronous>, transform_indices = @transform_1, window_bounds = array<i64: 256, 32>}, {pipeline_mode = #tpu.pipeline_mode<synchronous>, transform_indices = @transform_2, window_bounds = array<i64: 256, 1>}, {pipeline_mode = #tpu.pipeline_mode<synchronous>, transform_indices = @transform_3, window_bounds = array<i64: 1, 256>}, {transform_indices = @transform_4, window_bounds = array<i64: 1>}, {transform_indices = @transform_5, window_bounds = array<i64: 1, 1, 8>}]} {
    %c0 = arith.constant 0 : index
    %c0_0 = arith.constant 0 : index
    %0 = vector.load %arg1[%c0, %c0_0] : memref<8x32xf32, #tpu.memory_space<vmem>>, vector<8x32xf32>
    %1 = arith.truncf %0 : vector<8x32xf32> to vector<8x32xbf16>
    %c0_1 = arith.constant 0 : index
    %c0_2 = arith.constant 0 : index
    %2 = vector.load %arg2[%c0_1, %c0_2] : memref<256x32xf32, #tpu.memory_space<vmem>>, vector<256x32xf32>
    %3 = arith.truncf %2 : vector<256x32xf32> to vector<256x32xbf16>
    %cst = arith.constant dense<0.000000e+00> : vector<256x8xf32>
    %4 = tpu.matmul %3, %1, %cst {dimension_numbers = #tpu.dot_dimension_numbers<[1], [1], [0], [0], [0, 0, 1, 0], [], []>} : vector<256x32xbf16>, vector<8x32xbf16>, vector<256x8xf32> -> vector<256x8xf32>
    %c0_3 = arith.constant 0 : index
    %c0_4 = arith.constant 0 : index
    %5 = vector.load %arg3[%c0_3, %c0_4] : memref<256x1xf32, #tpu.memory_space<vmem>>, vector<256x1xf32>
    %6 = vector.broadcast %5 : vector<256x1xf32> to vector<256x8xf32>
    %7 = arith.addf %4, %6 : vector<256x8xf32>
    %8 = arith.truncf %7 : vector<256x8xf32> to vector<256x8xbf16>
    %cst_5 = arith.constant 5.000000e-01 : bf16
    %9 = vector.broadcast %cst_5 : bf16 to vector<256x8xbf16>
    %10 = arith.mulf %8, %9 : vector<256x8xbf16>
    %11 = math.tanh %10 : vector<256x8xbf16>
    %cst_6 = arith.constant 5.000000e-01 : bf16
    %12 = vector.broadcast %cst_6 : bf16 to vector<256x8xbf16>
    %13 = arith.mulf %11, %12 : vector<256x8xbf16>
    %cst_7 = arith.constant 5.000000e-01 : bf16
    %14 = vector.broadcast %cst_7 : bf16 to vector<256x8xbf16>
    %15 = arith.addf %13, %14 : vector<256x8xbf16>
    %c0_8 = arith.constant 0 : index
    %c0_9 = arith.constant 0 : index
    %16 = vector.load %arg4[%c0_8, %c0_9] : memref<1x256xf32, #tpu.memory_space<vmem>>, vector<1x256xf32>
    %17 = arith.truncf %16 : vector<1x256xf32> to vector<1x256xbf16>
    %cst_10 = arith.constant dense<0.000000e+00> : vector<1x8xf32>
    %18 = tpu.matmul %17, %15, %cst_10 {dimension_numbers = #tpu.dot_dimension_numbers<[1], [0], [0], [1], [0, 0, 1, 1], [], []>} : vector<1x256xbf16>, vector<256x8xbf16>, vector<1x8xf32> -> vector<1x8xf32>
    %c0_11 = arith.constant 0 : index
    %19 = memref.load %arg5[%c0_11] : memref<1xf32, #tpu.memory_space<smem>>
    %20 = vector.broadcast %19 : f32 to vector<1x8xf32>
    %21 = arith.addf %18, %20 : vector<1x8xf32>
    %cst_12 = arith.constant dense<0xFF800000> : vector<8xf32>
    %22 = vector.multi_reduction <maximumf>, %21, %cst_12 [0] : vector<1x8xf32> to vector<8xf32>
    %23 = vector.shape_cast %22 : vector<8xf32> to vector<1x8xf32>
    %24 = arith.subf %21, %23 : vector<1x8xf32>
    %25 = math.exp %24 : vector<1x8xf32>
    %cst_13 = arith.constant dense<0.000000e+00> : vector<8xf32>
    %26 = vector.multi_reduction <add>, %25, %cst_13 [0] : vector<1x8xf32> to vector<8xf32>
    %27 = vector.shape_cast %26 : vector<8xf32> to vector<1x8xf32>
    %28 = arith.divf %25, %27 : vector<1x8xf32>
    %29 = vector.shape_cast %28 : vector<1x8xf32> to vector<1x1x8xf32>
    %c0_14 = arith.constant 0 : index
    %c0_15 = arith.constant 0 : index
    %c0_16 = arith.constant 0 : index
    %30 = vector.load %arg6[%c0_14, %c0_15, %c0_16] : memref<1x1x8xf32, #tpu.memory_space<vmem>>, vector<1x1x8xf32>
    tpu.vector_store %arg6[%c0_14, %c0_15, %c0_16], %29 {strides = array<i32>} : memref<1x1x8xf32, #tpu.memory_space<vmem>>, vector<1x1x8xf32>,
    return
  }
  func.func @transform_0(%arg0: i32) -> (i32, i32) {
    %c0_i32 = arith.constant 0 : i32
    %c0_i32_0 = arith.constant 0 : i32
    return %arg0, %c0_i32 : i32, i32
  }
  func.func @transform_1(%arg0: i32) -> (i32, i32) {
    %c0_i32 = arith.constant 0 : i32
    %c0_i32_0 = arith.constant 0 : i32
    %c0_i32_1 = arith.constant 0 : i32
    return %c0_i32, %c0_i32_0 : i32, i32
  }
  func.func @transform_2(%arg0: i32) -> (i32, i32) {
    %c0_i32 = arith.constant 0 : i32
    %c0_i32_0 = arith.constant 0 : i32
    %c0_i32_1 = arith.constant 0 : i32
    return %c0_i32, %c0_i32_0 : i32, i32
  }
  func.func @transform_3(%arg0: i32) -> (i32, i32) {
    %c0_i32 = arith.constant 0 : i32
    %c0_i32_0 = arith.constant 0 : i32
    %c0_i32_1 = arith.constant 0 : i32
    return %c0_i32, %c0_i32_0 : i32, i32
  }
  func.func @transform_4(%arg0: i32) -> i32 {
    %c0_i32 = arith.constant 0 : i32
    %c0_i32_0 = arith.constant 0 : i32
    return %c0_i32 : i32
  }
  func.func @transform_5(%arg0: i32) -> (i32, i32, i32) {
    %c0_i32 = arith.constant 0 : i32
    %c0_i32_0 = arith.constant 0 : i32
    %c0_i32_1 = arith.constant 0 : i32
    return %arg0, %c0_i32, %c0_i32_0 : i32, i32, i32
  }
}

</mosaic_0001>

<llo_original>
// kernel: tpu_custom_call.1
$region0: #{tpu_custom_call.1}
  #allocation0 [shape = 'u32[]', space=smem, size = 0x4, offset = 0x4, fixed_abs, tag = 'smem constant byte address 0x4 - core index']
  #allocation1 [shape = 'u32[72,128]{1,0:T(1,128)}', space=vmem, size = 0x9000, scoped, tag = 'internal scratch']
  #allocation2 [shape = 'f32[1]{0:T(128)S(6)}', space=smem, size = 0x200, scoped, tag = 'scoped memory for tpu_custom_call.1']
  %s0 = inlined_call_operand.vmem [shape: f32[8,32], index: 0, kind: input, shape index: {}]
  %s1 = inlined_call_operand.vmem [shape: f32[256,32], index: 1, kind: input, shape index: {}]
  %s2 = inlined_call_operand.vmem [shape: f32[256,1], index: 2, kind: input, shape index: {}]
  %s3 = inlined_call_operand.vmem [shape: f32[1,256], index: 3, kind: input, shape index: {}]
  %s4 = inlined_call_operand.<no memory space> [shape: f32[1], index: 4, kind: input, shape index: {}]
  %s5 = inlined_call_operand.hbm [shape: f32[1,1,8], index: 5, kind: output, shape index: {}]
  %s6 = sld [smem:[#allocation0]]
  $region30: #{tpu_custom_call.1} parent=0
    _
  %s8 = ssub.s32 1, %s6
  %s9 = scalar_select 0, %s8, %s6
  %10 = sst [smem:[#allocation2]] %s4
  $region1: #{tpu_custom_call.1} parent=0
    #allocation3 [shape = 'u8[512]{0}', space=vmem, size = 0x400, scoped, tag = 'output window, operand 0, single buffered']
    #allocation4 [shape = 's32[1]{0}', space=sflag, size = 0x4, scoped, tag = 'scoped memory for tpu_custom_call.1']
    %11 = vsyncpa [#allocation4], 0
    // Predicated region
    $region2: #{tpu_custom_call.1} parent=1 // pred_check
      _
    $region3: #{tpu_custom_call.1} parent=1 // pred_check_branch
      %13 = sbr.rel (0) target = $region5
    $region4: #{tpu_custom_call.1} parent=1 // pred_region
      _
    $region5: #{tpu_custom_call.1} parent=1 // pred_fallthru
      _
    // Predicated region
    $region6: #{tpu_custom_call.1} parent=1 // pred_check
      _
    $region7: #{tpu_custom_call.1} parent=1 // pred_check_branch
      %15 = sbr.rel (0) target = $region9
    $region8: #{tpu_custom_call.1} parent=1 // pred_region
      _
    $region9: #{tpu_custom_call.1} parent=1 // pred_fallthru
      _
    // Predicated region
    $region10: #{tpu_custom_call.1} parent=1 // pred_check
      _
    $region11: #{tpu_custom_call.1} parent=1 // pred_check_branch
      %17 = sbr.rel (0) target = $region13
    $region12: #{tpu_custom_call.1} parent=1 // pred_region
      _
    $region13: #{tpu_custom_call.1} parent=1 // pred_fallthru
      _
    // Predicated region
    $region14: #{tpu_custom_call.1} parent=1 // pred_check
      _
    $region15: #{tpu_custom_call.1} parent=1 // pred_check_branch
      %19 = sbr.rel (0) target = $region17
    $region16: #{tpu_custom_call.1} parent=1 // pred_region
      _
    $region17: #{tpu_custom_call.1} parent=1 // pred_fallthru
      _
    // Predicated region
    $region18: #{tpu_custom_call.1} parent=1 // pred_check
      _
    $region19: #{tpu_custom_call.1} parent=1 // pred_check_branch
      %21 = sbr.rel (0) target = $region21
    $region20: #{tpu_custom_call.1} parent=1 // pred_region
      _
    $region21: #{tpu_custom_call.1} parent=1 // pred_fallthru
      _
    %v23 = vld [vmem:[%s0] sm:$0xff]
    %v24 = vpack.c.bf16 %v23, %v23
    %v25 = vld [vmem:[%s1] sm:$0xff]
    %v26 = vld [vmem:[%s1 + $0x8] sm:$0xff]
    %v27 = vld [vmem:[%s1 + $0x10] sm:$0xff]
    %v28 = vld [vmem:[%s1 + $0x18] sm:$0xff]
    %v29 = vld [vmem:[%s1 + $0x20] sm:$0xff]
    %v30 = vld [vmem:[%s1 + $0x28] sm:$0xff]
    %v31 = vld [vmem:[%s1 + $0x30] sm:$0xff]
    %v32 = vld [vmem:[%s1 + $0x38] sm:$0xff]
    %v33 = vld [vmem:[%s1 + $0x40] sm:$0xff]
    %v34 = vld [vmem:[%s1 + $0x48] sm:$0xff]
    %v35 = vld [vmem:[%s1 + $0x50] sm:$0xff]
    %v36 = vld [vmem:[%s1 + $0x58] sm:$0xff]
    %v37 = vld [vmem:[%s1 + $0x60] sm:$0xff]
    %v38 = vld [vmem:[%s1 + $0x68] sm:$0xff]
    %v39 = vld [vmem:[%s1 + $0x70] sm:$0xff]
    %v40 = vld [vmem:[%s1 + $0x78] sm:$0xff]
    %v41 = vld [vmem:[%s1 + $0x80] sm:$0xff]
    %v42 = vld [vmem:[%s1 + $0x88] sm:$0xff]
    %v43 = vld [vmem:[%s1 + $0x90] sm:$0xff]
    %v44 = vld [vmem:[%s1 + $0x98] sm:$0xff]
    %v45 = vld [vmem:[%s1 + $0xa0] sm:$0xff]
    %v46 = vld [vmem:[%s1 + $0xa8] sm:$0xff]
    %v47 = vld [vmem:[%s1 + $0xb0] sm:$0xff]
    %v48 = vld [vmem:[%s1 + $0xb8] sm:$0xff]
    %v49 = vld [vmem:[%s1 + $0xc0] sm:$0xff]
    %v50 = vld [vmem:[%s1 + $0xc8] sm:$0xff]
    %v51 = vld [vmem:[%s1 + $0xd0] sm:$0xff]
    %v52 = vld [vmem:[%s1 + $0xd8] sm:$0xff]
    %v53 = vld [vmem:[%s1 + $0xe0] sm:$0xff]
    %v54 = vld [vmem:[%s1 + $0xe8] sm:$0xff]
    %v55 = vld [vmem:[%s1 + $0xf0] sm:$0xff]
    %v56 = vld [vmem:[%s1 + $0xf8] sm:$0xff]
    %v57 = vpack.c.bf16 %v26, %v25
    %v58 = vpack.c.bf16 %v28, %v27
    %v59 = vpack.c.bf16 %v30, %v29
    %v60 = vpack.c.bf16 %v32, %v31
    %v61 = vpack.c.bf16 %v34, %v33
    %v62 = vpack.c.bf16 %v36, %v35
    %v63 = vpack.c.bf16 %v38, %v37
    %v64 = vpack.c.bf16 %v40, %v39
    %v65 = vpack.c.bf16 %v42, %v41
    %v66 = vpack.c.bf16 %v44, %v43
    %v67 = vpack.c.bf16 %v46, %v45
    %v68 = vpack.c.bf16 %v48, %v47
    %v69 = vpack.c.bf16 %v50, %v49
    %v70 = vpack.c.bf16 %v52, %v51
    %v71 = vpack.c.bf16 %v54, %v53
    %v72 = vpack.c.bf16 %v56, %v55
    %v73 = vld [vmem:[%s2] sm:$0xff]
    %v74 = vld [vmem:[%s2 + $0x8] sm:$0xff]
    %v75 = vld [vmem:[%s2 + $0x10] sm:$0xff]
    %v76 = vld [vmem:[%s2 + $0x18] sm:$0xff]
    %v77 = vld [vmem:[%s2 + $0x20] sm:$0xff]
    %v78 = vld [vmem:[%s2 + $0x28] sm:$0xff]
    %v79 = vld [vmem:[%s2 + $0x30] sm:$0xff]
    %v80 = vld [vmem:[%s2 + $0x38] sm:$0xff]
    %v81 = vld [vmem:[%s2 + $0x40] sm:$0xff]
    %v82 = vld [vmem:[%s2 + $0x48] sm:$0xff]
    %v83 = vld [vmem:[%s2 + $0x50] sm:$0xff]
    %v84 = vld [vmem:[%s2 + $0x58] sm:$0xff]
    %v85 = vld [vmem:[%s2 + $0x60] sm:$0xff]
    %v86 = vld [vmem:[%s2 + $0x68] sm:$0xff]
    %v87 = vld [vmem:[%s2 + $0x70] sm:$0xff]
    %v88 = vld [vmem:[%s2 + $0x78] sm:$0xff]
    %v89 = vld [vmem:[%s2 + $0x80] sm:$0xff]
    %v90 = vld [vmem:[%s2 + $0x88] sm:$0xff]
    %v91 = vld [vmem:[%s2 + $0x90] sm:$0xff]
    %v92 = vld [vmem:[%s2 + $0x98] sm:$0xff]
    %v93 = vld [vmem:[%s2 + $0xa0] sm:$0xff]
    %v94 = vld [vmem:[%s2 + $0xa8] sm:$0xff]
    %v95 = vld [vmem:[%s2 + $0xb0] sm:$0xff]
    %v96 = vld [vmem:[%s2 + $0xb8] sm:$0xff]
    %v97 = vld [vmem:[%s2 + $0xc0] sm:$0xff]
    %v98 = vld [vmem:[%s2 + $0xc8] sm:$0xff]
    %v99 = vld [vmem:[%s2 + $0xd0] sm:$0xff]
    %v100 = vld [vmem:[%s2 + $0xd8] sm:$0xff]
    %v101 = vld [vmem:[%s2 + $0xe0] sm:$0xff]
    %v102 = vld [vmem:[%s2 + $0xe8] sm:$0xff]
    %v103 = vld [vmem:[%s2 + $0xf0] sm:$0xff]
    %v104 = vld [vmem:[%s2 + $0xf8] sm:$0xff]
    %106 = vset.pattern.permute.xlu0 0
    %107 = vperm.xlu0 %106, %v73
    %v108 = vpop.permute.xlu0 %107
    %111 = vset.pattern.permute.xlu0 0
    %112 = vperm.xlu0 %111, %v74
    %v113 = vpop.permute.xlu0 %112
    %116 = vset.pattern.permute.xlu0 0
    %117 = vperm.xlu0 %116, %v75
    %v118 = vpop.permute.xlu0 %117
    %121 = vset.pattern.permute.xlu0 0
    %122 = vperm.xlu0 %121, %v76
    %v123 = vpop.permute.xlu0 %122
    %126 = vset.pattern.permute.xlu0 0
    %127 = vperm.xlu0 %126, %v77
    %v128 = vpop.permute.xlu0 %127
    %131 = vset.pattern.permute.xlu0 0
    %132 = vperm.xlu0 %131, %v78
    %v133 = vpop.permute.xlu0 %132
    %136 = vset.pattern.permute.xlu0 0
    %137 = vperm.xlu0 %136, %v79
    %v138 = vpop.permute.xlu0 %137
    %141 = vset.pattern.permute.xlu0 0
    %142 = vperm.xlu0 %141, %v80
    %v143 = vpop.permute.xlu0 %142
    %146 = vset.pattern.permute.xlu0 0
    %147 = vperm.xlu0 %146, %v81
    %v148 = vpop.permute.xlu0 %147
    %151 = vset.pattern.permute.xlu0 0
    %152 = vperm.xlu0 %151, %v82
    %v153 = vpop.permute.xlu0 %152
    %156 = vset.pattern.permute.xlu0 0
    %157 = vperm.xlu0 %156, %v83
    %v158 = vpop.permute.xlu0 %157
    %161 = vset.pattern.permute.xlu0 0
    %162 = vperm.xlu0 %161, %v84
    %v163 = vpop.permute.xlu0 %162
    %166 = vset.pattern.permute.xlu0 0
    %167 = vperm.xlu0 %166, %v85
    %v168 = vpop.permute.xlu0 %167
    %171 = vset.pattern.permute.xlu0 0
    %172 = vperm.xlu0 %171, %v86
    %v173 = vpop.permute.xlu0 %172
    %176 = vset.pattern.permute.xlu0 0
    %177 = vperm.xlu0 %176, %v87
    %v178 = vpop.permute.xlu0 %177
    %181 = vset.pattern.permute.xlu0 0
    %182 = vperm.xlu0 %181, %v88
    %v183 = vpop.permute.xlu0 %182
    %186 = vset.pattern.permute.xlu0 0
    %187 = vperm.xlu0 %186, %v89
    %v188 = vpop.permute.xlu0 %187
    %191 = vset.pattern.permute.xlu0 0
    %192 = vperm.xlu0 %191, %v90
    %v193 = vpop.permute.xlu0 %192
    %196 = vset.pattern.permute.xlu0 0
    %197 = vperm.xlu0 %196, %v91
    %v198 = vpop.permute.xlu0 %197
    %201 = vset.pattern.permute.xlu0 0
    %202 = vperm.xlu0 %201, %v92
    %v203 = vpop.permute.xlu0 %202
    %206 = vset.pattern.permute.xlu0 0
    %207 = vperm.xlu0 %206, %v93
    %v208 = vpop.permute.xlu0 %207
    %211 = vset.pattern.permute.xlu0 0
    %212 = vperm.xlu0 %211, %v94
    %v213 = vpop.permute.xlu0 %212
    %216 = vset.pattern.permute.xlu0 0
    %217 = vperm.xlu0 %216, %v95
    %v218 = vpop.permute.xlu0 %217
    %221 = vset.pattern.permute.xlu0 0
    %222 = vperm.xlu0 %221, %v96
    %v223 = vpop.permute.xlu0 %222
    %226 = vset.pattern.permute.xlu0 0
    %227 = vperm.xlu0 %226, %v97
    %v228 = vpop.permute.xlu0 %227
    %231 = vset.pattern.permute.xlu0 0
    %232 = vperm.xlu0 %231, %v98
    %v233 = vpop.permute.xlu0 %232
    %236 = vset.pattern.permute.xlu0 0
    %237 = vperm.xlu0 %236, %v99
    %v238 = vpop.permute.xlu0 %237
    %241 = vset.pattern.permute.xlu0 0
    %242 = vperm.xlu0 %241, %v100
    %v243 = vpop.permute.xlu0 %242
    %246 = vset.pattern.permute.xlu0 0
    %247 = vperm.xlu0 %246, %v101
    %v248 = vpop.permute.xlu0 %247
    %251 = vset.pattern.permute.xlu0 0
    %252 = vperm.xlu0 %251, %v102
    %v253 = vpop.permute.xlu0 %252
    %256 = vset.pattern.permute.xlu0 0
    %257 = vperm.xlu0 %256, %v103
    %v258 = vpop.permute.xlu0 %257
    %261 = vset.pattern.permute.xlu0 0
    %262 = vperm.xlu0 %261, %v104
    %v263 = vpop.permute.xlu0 %262
    %vm265 = vcmask 261120
    %v267 = vsel %vm265, %v57, 0
    %v270 = vsel %vm265, %v58, 0
    %v273 = vsel %vm265, %v59, 0
    %v276 = vsel %vm265, %v60, 0
    %v279 = vsel %vm265, %v61, 0
    %v282 = vsel %vm265, %v62, 0
    %v285 = vsel %vm265, %v63, 0
    %v288 = vsel %vm265, %v64, 0
    %v291 = vsel %vm265, %v65, 0
    %v294 = vsel %vm265, %v66, 0
    %v297 = vsel %vm265, %v67, 0
    %v300 = vsel %vm265, %v68, 0
    %v303 = vsel %vm265, %v69, 0
    %v306 = vsel %vm265, %v70, 0
    %v309 = vsel %vm265, %v71, 0
    %v312 = vsel %vm265, %v72, 0
    %v315 = vsel %vm265, %v24, 0
    %317 = vmatpush.bf16.xpose.msra.mxu0 0
    %318 = vmatpush.bf16.xpose.msra.mxu0 0
    %319 = vmatpush.bf16.xpose.msra.mxu0 0
    %320 = vmatpush.bf16.xpose.msra.mxu0 0
    %321 = vmatpush.bf16.xpose.msra.mxu0 0
    %322 = vmatpush.bf16.xpose.msra.mxu0 0
    %323 = vmatpush.bf16.xpose.msra.mxu0 0
    %324 = vmatpush.bf16.xpose.msra.mxu0 %v315
    %325 = vmatmul.bf16.gmra.mxu0 %v267
    %v326 = vpop.f32.mrf.mxu0
    %v327 = vadd.f32 %v108, %v326
    %v328 = vpop.f32.mrf.mxu0
    %v329 = vadd.f32 %v113, %v328
    %330 = vmatmul.bf16.gmra.mxu0 %v270
    %v331 = vpop.f32.mrf.mxu0
    %v332 = vadd.f32 %v118, %v331
    %v333 = vpop.f32.mrf.mxu0
    %v334 = vadd.f32 %v123, %v333
    %335 = vmatmul.bf16.gmra.mxu0 %v273
    %v336 = vpop.f32.mrf.mxu0
    %v337 = vadd.f32 %v128, %v336
    %v338 = vpop.f32.mrf.mxu0
    %v339 = vadd.f32 %v133, %v338
    %340 = vmatmul.bf16.gmra.mxu0 %v276
    %v341 = vpop.f32.mrf.mxu0
    %v342 = vadd.f32 %v138, %v341
    %v343 = vpop.f32.mrf.mxu0
    %v344 = vadd.f32 %v143, %v343
    %345 = vmatmul.bf16.gmra.mxu0 %v279
    %v346 = vpop.f32.mrf.mxu0
    %v347 = vadd.f32 %v148, %v346
    %v348 = vpop.f32.mrf.mxu0
    %v349 = vadd.f32 %v153, %v348
    %350 = vmatmul.bf16.gmra.mxu0 %v282
    %v351 = vpop.f32.mrf.mxu0
    %v352 = vadd.f32 %v158, %v351
    %v353 = vpop.f32.mrf.mxu0
    %v354 = vadd.f32 %v163, %v353
    %355 = vmatmul.bf16.gmra.mxu0 %v285
    %v356 = vpop.f32.mrf.mxu0
    %v357 = vadd.f32 %v168, %v356
    %v358 = vpop.f32.mrf.mxu0
    %v359 = vadd.f32 %v173, %v358
    %360 = vmatmul.bf16.gmra.mxu0 %v288
    %v361 = vpop.f32.mrf.mxu0
    %v362 = vadd.f32 %v178, %v361
    %v363 = vpop.f32.mrf.mxu0
    %v364 = vadd.f32 %v183, %v363
    %365 = vmatmul.bf16.gmra.mxu0 %v291
    %v366 = vpop.f32.mrf.mxu0
    %v367 = vadd.f32 %v188, %v366
    %v368 = vpop.f32.mrf.mxu0
    %v369 = vadd.f32 %v193, %v368
    %370 = vmatmul.bf16.gmra.mxu0 %v294
    %v371 = vpop.f32.mrf.mxu0
    %v372 = vadd.f32 %v198, %v371
    %v373 = vpop.f32.mrf.mxu0
    %v374 = vadd.f32 %v203, %v373
    %375 = vmatmul.bf16.gmra.mxu0 %v297
    %v376 = vpop.f32.mrf.mxu0
    %v377 = vadd.f32 %v208, %v376
    %v378 = vpop.f32.mrf.mxu0
    %v379 = vadd.f32 %v213, %v378
    %380 = vmatmul.bf16.gmra.mxu0 %v300
    %v381 = vpop.f32.mrf.mxu0
    %v382 = vadd.f32 %v218, %v381
    %v383 = vpop.f32.mrf.mxu0
    %v384 = vadd.f32 %v223, %v383
    %385 = vmatmul.bf16.gmra.mxu0 %v303
    %v386 = vpop.f32.mrf.mxu0
    %v387 = vadd.f32 %v228, %v386
    %v388 = vpop.f32.mrf.mxu0
    %v389 = vadd.f32 %v233, %v388
    %390 = vmatmul.bf16.gmra.mxu0 %v306
    %v391 = vpop.f32.mrf.mxu0
    %v392 = vadd.f32 %v238, %v391
    %v393 = vpop.f32.mrf.mxu0
    %v394 = vadd.f32 %v243, %v393
    %395 = vmatmul.bf16.gmra.mxu0 %v309
    %v396 = vpop.f32.mrf.mxu0
    %v397 = vadd.f32 %v248, %v396
    %v398 = vpop.f32.mrf.mxu0
    %v399 = vadd.f32 %v253, %v398
    %400 = vmatmul.bf16.gmra.mxu0 %v312
    %v401 = vpop.f32.mrf.mxu0
    %v402 = vadd.f32 %v258, %v401
    %v403 = vpop.f32.mrf.mxu0
    %v404 = vadd.f32 %v263, %v403
    %405 = vdwg.mxu0
    %v406 = vpack.c.bf16 %v327, %v327
    %v407 = vpack.c.bf16 %v329, %v329
    %v408 = vpack.c.bf16 %v332, %v332
    %v409 = vpack.c.bf16 %v334, %v334
    %v410 = vpack.c.bf16 %v337, %v337
    %v411 = vpack.c.bf16 %v339, %v339
    %v412 = vpack.c.bf16 %v342, %v342
    %v413 = vpack.c.bf16 %v344, %v344
    %v414 = vpack.c.bf16 %v347, %v347
    %v415 = vpack.c.bf16 %v349, %v349
    %v416 = vpack.c.bf16 %v352, %v352
    %v417 = vpack.c.bf16 %v354, %v354
    %v418 = vpack.c.bf16 %v357, %v357
    %v419 = vpack.c.bf16 %v359, %v359
    %v420 = vpack.c.bf16 %v362, %v362
    %v421 = vpack.c.bf16 %v364, %v364
    %v422 = vpack.c.bf16 %v367, %v367
    %v423 = vpack.c.bf16 %v369, %v369
    %v424 = vpack.c.bf16 %v372, %v372
    %v425 = vpack.c.bf16 %v374, %v374
    %v426 = vpack.c.bf16 %v377, %v377
    %v427 = vpack.c.bf16 %v379, %v379
    %v428 = vpack.c.bf16 %v382, %v382
    %v429 = vpack.c.bf16 %v384, %v384
    %v430 = vpack.c.bf16 %v387, %v387
    %v431 = vpack.c.bf16 %v389, %v389
    %v432 = vpack.c.bf16 %v392, %v392
    %v433 = vpack.c.bf16 %v394, %v394
    %v434 = vpack.c.bf16 %v397, %v397
    %v435 = vpack.c.bf16 %v399, %v399
    %v436 = vpack.c.bf16 %v402, %v402
    %v437 = vpack.c.bf16 %v404, %v404
    %v438 = vunpack.c.l.bf16 %v406
    %v439 = vunpack.c.l.bf16 %v407
    %v440 = vunpack.c.l.bf16 %v408
    %v441 = vunpack.c.l.bf16 %v409
    %v442 = vunpack.c.l.bf16 %v410
    %v443 = vunpack.c.l.bf16 %v411
    %v444 = vunpack.c.l.bf16 %v412
    %v445 = vunpack.c.l.bf16 %v413
    %v446 = vunpack.c.l.bf16 %v414
    %v447 = vunpack.c.l.bf16 %v415
    %v448 = vunpack.c.l.bf16 %v416
    %v449 = vunpack.c.l.bf16 %v417
    %v450 = vunpack.c.l.bf16 %v418
    %v451 = vunpack.c.l.bf16 %v419
    %v452 = vunpack.c.l.bf16 %v420
    %v453 = vunpack.c.l.bf16 %v421
    %v454 = vunpack.c.l.bf16 %v422
    %v455 = vunpack.c.l.bf16 %v423
    %v456 = vunpack.c.l.bf16 %v424
    %v457 = vunpack.c.l.bf16 %v425
    %v458 = vunpack.c.l.bf16 %v426
    %v459 = vunpack.c.l.bf16 %v427
    %v460 = vunpack.c.l.bf16 %v428
    %v461 = vunpack.c.l.bf16 %v429
    %v462 = vunpack.c.l.bf16 %v430
    %v463 = vunpack.c.l.bf16 %v431
    %v464 = vunpack.c.l.bf16 %v432
    %v465 = vunpack.c.l.bf16 %v433
    %v466 = vunpack.c.l.bf16 %v434
    %v467 = vunpack.c.l.bf16 %v435
    %v468 = vunpack.c.l.bf16 %v436
    %v469 = vunpack.c.l.bf16 %v437
    %v470 = vmul.f32 %v438, 0.5
    %v471 = vmul.f32 %v439, 0.5
    %v472 = vmul.f32 %v440, 0.5
    %v473 = vmul.f32 %v441, 0.5
    %v474 = vmul.f32 %v442, 0.5
    %v475 = vmul.f32 %v443, 0.5
    %v476 = vmul.f32 %v444, 0.5
    %v477 = vmul.f32 %v445, 0.5
    %v478 = vmul.f32 %v446, 0.5
    %v479 = vmul.f32 %v447, 0.5
    %v480 = vmul.f32 %v448, 0.5
    %v481 = vmul.f32 %v449, 0.5
    %v482 = vmul.f32 %v450, 0.5
    %v483 = vmul.f32 %v451, 0.5
    %v484 = vmul.f32 %v452, 0.5
    %v485 = vmul.f32 %v453, 0.5
    %v486 = vmul.f32 %v454, 0.5
    %v487 = vmul.f32 %v455, 0.5
    %v488 = vmul.f32 %v456, 0.5
    %v489 = vmul.f32 %v457, 0.5
    %v490 = vmul.f32 %v458, 0.5
    %v491 = vmul.f32 %v459, 0.5
    %v492 = vmul.f32 %v460, 0.5
    %v493 = vmul.f32 %v461, 0.5
    %v494 = vmul.f32 %v462, 0.5
    %v495 = vmul.f32 %v463, 0.5
    %v496 = vmul.f32 %v464, 0.5
    %v497 = vmul.f32 %v465, 0.5
    %v498 = vmul.f32 %v466, 0.5
    %v499 = vmul.f32 %v467, 0.5
    %v500 = vmul.f32 %v468, 0.5
    %v501 = vmul.f32 %v469, 0.5
    %v502 = vpack.c.bf16 %v470, %v470
    %v503 = vpack.c.bf16 %v471, %v471
    %v504 = vpack.c.bf16 %v472, %v472
    %v505 = vpack.c.bf16 %v473, %v473
    %v506 = vpack.c.bf16 %v474, %v474
    %v507 = vpack.c.bf16 %v475, %v475
    %v508 = vpack.c.bf16 %v476, %v476
    %v509 = vpack.c.bf16 %v477, %v477
    %v510 = vpack.c.bf16 %v478, %v478
    %v511 = vpack.c.bf16 %v479, %v479
    %v512 = vpack.c.bf16 %v480, %v480
    %v513 = vpack.c.bf16 %v481, %v481
    %v514 = vpack.c.bf16 %v482, %v482
    %v515 = vpack.c.bf16 %v483, %v483
    %v516 = vpack.c.bf16 %v484, %v484
    %v517 = vpack.c.bf16 %v485, %v485
    %v518 = vpack.c.bf16 %v486, %v486
    %v519 = vpack.c.bf16 %v487, %v487
    %v520 = vpack.c.bf16 %v488, %v488
    %v521 = vpack.c.bf16 %v489, %v489
    %v522 = vpack.c.bf16 %v490, %v490
    %v523 = vpack.c.bf16 %v491, %v491
    %v524 = vpack.c.bf16 %v492, %v492
    %v525 = vpack.c.bf16 %v493, %v493
    %v526 = vpack.c.bf16 %v494, %v494
    %v527 = vpack.c.bf16 %v495, %v495
    %v528 = vpack.c.bf16 %v496, %v496
    %v529 = vpack.c.bf16 %v497, %v497
    %v530 = vpack.c.bf16 %v498, %v498
    %v531 = vpack.c.bf16 %v499, %v499
    %v532 = vpack.c.bf16 %v500, %v500
    %v533 = vpack.c.bf16 %v501, %v501
    %v534 = vunpack.c.l.bf16 %v502
    %v535 = vunpack.c.l.bf16 %v503
    %v536 = vunpack.c.l.bf16 %v504
    %v537 = vunpack.c.l.bf16 %v505
    %v538 = vunpack.c.l.bf16 %v506
    %v539 = vunpack.c.l.bf16 %v507
    %v540 = vunpack.c.l.bf16 %v508
    %v541 = vunpack.c.l.bf16 %v509
    %v542 = vunpack.c.l.bf16 %v510
    %v543 = vunpack.c.l.bf16 %v511
    %v544 = vunpack.c.l.bf16 %v512
    %v545 = vunpack.c.l.bf16 %v513
    %v546 = vunpack.c.l.bf16 %v514
    %v547 = vunpack.c.l.bf16 %v515
    %v548 = vunpack.c.l.bf16 %v516
    %v549 = vunpack.c.l.bf16 %v517
    %v550 = vunpack.c.l.bf16 %v518
    %v551 = vunpack.c.l.bf16 %v519
    %v552 = vunpack.c.l.bf16 %v520
    %v553 = vunpack.c.l.bf16 %v521
    %v554 = vunpack.c.l.bf16 %v522
    %v555 = vunpack.c.l.bf16 %v523
    %v556 = vunpack.c.l.bf16 %v524
    %v557 = vunpack.c.l.bf16 %v525
    %v558 = vunpack.c.l.bf16 %v526
    %v559 = vunpack.c.l.bf16 %v527
    %v560 = vunpack.c.l.bf16 %v528
    %v561 = vunpack.c.l.bf16 %v529
    %v562 = vunpack.c.l.bf16 %v530
    %v563 = vunpack.c.l.bf16 %v531
    %v564 = vunpack.c.l.bf16 %v532
    %v565 = vunpack.c.l.bf16 %v533
    %v566 = vtanh.pop %v534
    %v567 = vtanh.pop %v535
    %v568 = vtanh.pop %v536
    %v569 = vtanh.pop %v537
    %v570 = vtanh.pop %v538
    %v571 = vtanh.pop %v539
    %v572 = vtanh.pop %v540
    %v573 = vtanh.pop %v541
    %v574 = vtanh.pop %v542
    %v575 = vtanh.pop %v543
    %v576 = vtanh.pop %v544
    %v577 = vtanh.pop %v545
    %v578 = vtanh.pop %v546
    %v579 = vtanh.pop %v547
    %v580 = vtanh.pop %v548
    %v581 = vtanh.pop %v549
    %v582 = vtanh.pop %v550
    %v583 = vtanh.pop %v551
    %v584 = vtanh.pop %v552
    %v585 = vtanh.pop %v553
    %v586 = vtanh.pop %v554
    %v587 = vtanh.pop %v555
    %v588 = vtanh.pop %v556
    %v589 = vtanh.pop %v557
    %v590 = vtanh.pop %v558
    %v591 = vtanh.pop %v559
    %v592 = vtanh.pop %v560
    %v593 = vtanh.pop %v561
    %v594 = vtanh.pop %v562
    %v595 = vtanh.pop %v563
    %v596 = vtanh.pop %v564
    %v597 = vtanh.pop %v565
    %v598 = vpack.c.bf16 %v566, %v566
    %v599 = vpack.c.bf16 %v567, %v567
    %v600 = vpack.c.bf16 %v568, %v568
    %v601 = vpack.c.bf16 %v569, %v569
    %v602 = vpack.c.bf16 %v570, %v570
    %v603 = vpack.c.bf16 %v571, %v571
    %v604 = vpack.c.bf16 %v572, %v572
    %v605 = vpack.c.bf16 %v573, %v573
    %v606 = vpack.c.bf16 %v574, %v574
    %v607 = vpack.c.bf16 %v575, %v575
    %v608 = vpack.c.bf16 %v576, %v576
    %v609 = vpack.c.bf16 %v577, %v577
    %v610 = vpack.c.bf16 %v578, %v578
    %v611 = vpack.c.bf16 %v579, %v579
    %v612 = vpack.c.bf16 %v580, %v580
    %v613 = vpack.c.bf16 %v581, %v581
    %v614 = vpack.c.bf16 %v582, %v582
    %v615 = vpack.c.bf16 %v583, %v583
    %v616 = vpack.c.bf16 %v584, %v584
    %v617 = vpack.c.bf16 %v585, %v585
    %v618 = vpack.c.bf16 %v586, %v586
    %v619 = vpack.c.bf16 %v587, %v587
    %v620 = vpack.c.bf16 %v588, %v588
    %v621 = vpack.c.bf16 %v589, %v589
    %v622 = vpack.c.bf16 %v590, %v590
    %v623 = vpack.c.bf16 %v591, %v591
    %v624 = vpack.c.bf16 %v592, %v592
    %v625 = vpack.c.bf16 %v593, %v593
    %v626 = vpack.c.bf16 %v594, %v594
    %v627 = vpack.c.bf16 %v595, %v595
    %v628 = vpack.c.bf16 %v596, %v596
    %v629 = vpack.c.bf16 %v597, %v597
    %v630 = vunpack.c.l.bf16 %v598
    %v631 = vunpack.c.l.bf16 %v599
    %v632 = vunpack.c.l.bf16 %v600
    %v633 = vunpack.c.l.bf16 %v601
    %v634 = vunpack.c.l.bf16 %v602
    %v635 = vunpack.c.l.bf16 %v603
    %v636 = vunpack.c.l.bf16 %v604
    %v637 = vunpack.c.l.bf16 %v605
    %v638 = vunpack.c.l.bf16 %v606
    %v639 = vunpack.c.l.bf16 %v607
    %v640 = vunpack.c.l.bf16 %v608
    %v641 = vunpack.c.l.bf16 %v609
    %v642 = vunpack.c.l.bf16 %v610
    %v643 = vunpack.c.l.bf16 %v611
    %v644 = vunpack.c.l.bf16 %v612
    %v645 = vunpack.c.l.bf16 %v613
    %v646 = vunpack.c.l.bf16 %v614
    %v647 = vunpack.c.l.bf16 %v615
    %v648 = vunpack.c.l.bf16 %v616
    %v649 = vunpack.c.l.bf16 %v617
    %v650 = vunpack.c.l.bf16 %v618
    %v651 = vunpack.c.l.bf16 %v619
    %v652 = vunpack.c.l.bf16 %v620
    %v653 = vunpack.c.l.bf16 %v621
    %v654 = vunpack.c.l.bf16 %v622
    %v655 = vunpack.c.l.bf16 %v623
    %v656 = vunpack.c.l.bf16 %v624
    %v657 = vunpack.c.l.bf16 %v625
    %v658 = vunpack.c.l.bf16 %v626
    %v659 = vunpack.c.l.bf16 %v627
    %v660 = vunpack.c.l.bf16 %v628
    %v661 = vunpack.c.l.bf16 %v629
    %v662 = vmul.f32 %v630, 0.5
    %v663 = vmul.f32 %v631, 0.5
    %v664 = vmul.f32 %v632, 0.5
    %v665 = vmul.f32 %v633, 0.5
    %v666 = vmul.f32 %v634, 0.5
    %v667 = vmul.f32 %v635, 0.5
    %v668 = vmul.f32 %v636, 0.5
    %v669 = vmul.f32 %v637, 0.5
    %v670 = vmul.f32 %v638, 0.5
    %v671 = vmul.f32 %v639, 0.5
    %v672 = vmul.f32 %v640, 0.5
    %v673 = vmul.f32 %v641, 0.5
    %v674 = vmul.f32 %v642, 0.5
    %v675 = vmul.f32 %v643, 0.5
    %v676 = vmul.f32 %v644, 0.5
    %v677 = vmul.f32 %v645, 0.5
    %v678 = vmul.f32 %v646, 0.5
    %v679 = vmul.f32 %v647, 0.5
    %v680 = vmul.f32 %v648, 0.5
    %v681 = vmul.f32 %v649, 0.5
    %v682 = vmul.f32 %v650, 0.5
    %v683 = vmul.f32 %v651, 0.5
    %v684 = vmul.f32 %v652, 0.5
    %v685 = vmul.f32 %v653, 0.5
    %v686 = vmul.f32 %v654, 0.5
    %v687 = vmul.f32 %v655, 0.5
    %v688 = vmul.f32 %v656, 0.5
    %v689 = vmul.f32 %v657, 0.5
    %v690 = vmul.f32 %v658, 0.5
    %v691 = vmul.f32 %v659, 0.5
    %v692 = vmul.f32 %v660, 0.5
    %v693 = vmul.f32 %v661, 0.5
    %v694 = vpack.c.bf16 %v662, %v662
    %v695 = vpack.c.bf16 %v663, %v663
    %v696 = vpack.c.bf16 %v664, %v664
    %v697 = vpack.c.bf16 %v665, %v665
    %v698 = vpack.c.bf16 %v666, %v666
    %v699 = vpack.c.bf16 %v667, %v667
    %v700 = vpack.c.bf16 %v668, %v668
    %v701 = vpack.c.bf16 %v669, %v669
    %v702 = vpack.c.bf16 %v670, %v670
    %v703 = vpack.c.bf16 %v671, %v671
    %v704 = vpack.c.bf16 %v672, %v672
    %v705 = vpack.c.bf16 %v673, %v673
    %v706 = vpack.c.bf16 %v674, %v674
    %v707 = vpack.c.bf16 %v675, %v675
    %v708 = vpack.c.bf16 %v676, %v676
    %v709 = vpack.c.bf16 %v677, %v677
    %v710 = vpack.c.bf16 %v678, %v678
    %v711 = vpack.c.bf16 %v679, %v679
    %v712 = vpack.c.bf16 %v680, %v680
    %v713 = vpack.c.bf16 %v681, %v681
    %v714 = vpack.c.bf16 %v682, %v682
    %v715 = vpack.c.bf16 %v683, %v683
    %v716 = vpack.c.bf16 %v684, %v684
    %v717 = vpack.c.bf16 %v685, %v685
    %v718 = vpack.c.bf16 %v686, %v686
    %v719 = vpack.c.bf16 %v687, %v687
    %v720 = vpack.c.bf16 %v688, %v688
    %v721 = vpack.c.bf16 %v689, %v689
    %v722 = vpack.c.bf16 %v690, %v690
    %v723 = vpack.c.bf16 %v691, %v691
    %v724 = vpack.c.bf16 %v692, %v692
    %v725 = vpack.c.bf16 %v693, %v693
    %v726 = vunpack.c.l.bf16 %v694
    %v727 = vunpack.c.l.bf16 %v695
    %v728 = vunpack.c.l.bf16 %v696
    %v729 = vunpack.c.l.bf16 %v697
    %v730 = vunpack.c.l.bf16 %v698
    %v731 = vunpack.c.l.bf16 %v699
    %v732 = vunpack.c.l.bf16 %v700
    %v733 = vunpack.c.l.bf16 %v701
    %v734 = vunpack.c.l.bf16 %v702
    %v735 = vunpack.c.l.bf16 %v703
    %v736 = vunpack.c.l.bf16 %v704
    %v737 = vunpack.c.l.bf16 %v705
    %v738 = vunpack.c.l.bf16 %v706
    %v739 = vunpack.c.l.bf16 %v707
    %v740 = vunpack.c.l.bf16 %v708
    %v741 = vunpack.c.l.bf16 %v709
    %v742 = vunpack.c.l.bf16 %v710
    %v743 = vunpack.c.l.bf16 %v711
    %v744 = vunpack.c.l.bf16 %v712
    %v745 = vunpack.c.l.bf16 %v713
    %v746 = vunpack.c.l.bf16 %v714
    %v747 = vunpack.c.l.bf16 %v715
    %v748 = vunpack.c.l.bf16 %v716
    %v749 = vunpack.c.l.bf16 %v717
    %v750 = vunpack.c.l.bf16 %v718
    %v751 = vunpack.c.l.bf16 %v719
    %v752 = vunpack.c.l.bf16 %v720
    %v753 = vunpack.c.l.bf16 %v721
    %v754 = vunpack.c.l.bf16 %v722
    %v755 = vunpack.c.l.bf16 %v723
    %v756 = vunpack.c.l.bf16 %v724
    %v757 = vunpack.c.l.bf16 %v725
    %v758 = vadd.f32 %v726, 0.5
    %v759 = vadd.f32 %v727, 0.5
    %v760 = vadd.f32 %v728, 0.5
    %v761 = vadd.f32 %v729, 0.5
    %v762 = vadd.f32 %v730, 0.5
    %v763 = vadd.f32 %v731, 0.5
    %v764 = vadd.f32 %v732, 0.5
    %v765 = vadd.f32 %v733, 0.5
    %v766 = vadd.f32 %v734, 0.5
    %v767 = vadd.f32 %v735, 0.5
    %v768 = vadd.f32 %v736, 0.5
    %v769 = vadd.f32 %v737, 0.5
    %v770 = vadd.f32 %v738, 0.5
    %v771 = vadd.f32 %v739, 0.5
    %v772 = vadd.f32 %v740, 0.5
    %v773 = vadd.f32 %v741, 0.5
    %v774 = vadd.f32 %v742, 0.5
    %v775 = vadd.f32 %v743, 0.5
    %v776 = vadd.f32 %v744, 0.5
    %v777 = vadd.f32 %v745, 0.5
    %v778 = vadd.f32 %v746, 0.5
    %v779 = vadd.f32 %v747, 0.5
    %v780 = vadd.f32 %v748, 0.5
    %v781 = vadd.f32 %v749, 0.5
    %v782 = vadd.f32 %v750, 0.5
    %v783 = vadd.f32 %v751, 0.5
    %v784 = vadd.f32 %v752, 0.5
    %v785 = vadd.f32 %v753, 0.5
    %v786 = vadd.f32 %v754, 0.5
    %v787 = vadd.f32 %v755, 0.5
    %v788 = vadd.f32 %v756, 0.5
    %v789 = vadd.f32 %v757, 0.5
    %v790 = vpack.c.bf16 %v759, %v758
    %v791 = vpack.c.bf16 %v761, %v760
    %v792 = vpack.c.bf16 %v763, %v762
    %v793 = vpack.c.bf16 %v765, %v764
    %v794 = vpack.c.bf16 %v767, %v766
    %v795 = vpack.c.bf16 %v769, %v768
    %v796 = vpack.c.bf16 %v771, %v770
    %v797 = vpack.c.bf16 %v773, %v772
    %v798 = vpack.c.bf16 %v775, %v774
    %v799 = vpack.c.bf16 %v777, %v776
    %v800 = vpack.c.bf16 %v779, %v778
    %v801 = vpack.c.bf16 %v781, %v780
    %v802 = vpack.c.bf16 %v783, %v782
    %v803 = vpack.c.bf16 %v785, %v784
    %v804 = vpack.c.bf16 %v787, %v786
    %v805 = vpack.c.bf16 %v789, %v788
    %v806 = vld [vmem:[%s3] sm:$0x3]
    %v808 = vperm.slane %v806, 0
    %v809 = vperm.slane %v806, 1
    %v812 = vpack.c.bf16 %v808, %v808
    %v813 = vpack.c.bf16 %v809, %v809
    %s814 = sld [smem:[#allocation2]]
    %v815 = vstv %s814
    %816 = vmatpush.bf16.msra.mxu0 %v797
    %817 = vmatpush.bf16.msra.mxu0 %v796
    %818 = vmatpush.bf16.msra.mxu0 %v795
    %819 = vmatpush.bf16.msra.mxu0 %v794
    %820 = vmatpush.bf16.msra.mxu0 %v793
    %821 = vmatpush.bf16.msra.mxu0 %v792
    %822 = vmatpush.bf16.msra.mxu0 %v791
    %823 = vmatpush.bf16.msra.mxu0 %v790
    %824 = vmatmul.bf16.gmra.mxu0 %v812
    %v825 = vpop.f32.mrf.mxu0
    %v826 = vadd.f32 %v815, %v825
    %v827 = vpop.f32.mrf.mxu0
    %828 = vdwg.mxu0
    %829 = vmatpush.bf16.msra.mxu0 %v805
    %830 = vmatpush.bf16.msra.mxu0 %v804
    %831 = vmatpush.bf16.msra.mxu0 %v803
    %832 = vmatpush.bf16.msra.mxu0 %v802
    %833 = vmatpush.bf16.msra.mxu0 %v801
    %834 = vmatpush.bf16.msra.mxu0 %v800
    %835 = vmatpush.bf16.msra.mxu0 %v799
    %836 = vmatpush.bf16.msra.mxu0 %v798
    %837 = vmatmul.bf16.gmra.mxu0 %v813
    %v838 = vpop.f32.mrf.mxu0
    %v839 = vadd.f32 %v826, %v838
    %v840 = vpop.f32.mrf.mxu0
    %841 = vdwg.mxu0
    %v842 = vsub.f32 %v839, %v839
    %v843 = vmul.f32 %v842, 1.442695
    %v844 = vpow.pop %v843
    %v845 = vadd.f32 %v844, 0.0
    %v846 = vrcp.pop %v845
    %v847 = vmul.f32 %v845, %v846
    %v848 = vsub.f32 1.0, %v847
    %v849 = vmul.f32 %v846, %v848
    %v850 = vadd.f32 %v846, %v849
    %vm851 = vweird.f32 %v845
    %vm852 = vweird.f32 %v846
    %vm853 = vmor %vm851, %vm852
    %v854 = vsel %vm853, %v846, %v850
    %v855 = vand.u32 2147483647, %v845
    %vm856 = vcmp.eq.f32.partialorder %v855, 8.507059e+37
    %v857 = vand.u32 %v845, 2147483648
    %v858 = vor.u32 1.1754944e-38, %v857
    %v859 = vsel %vm856, %v858, %v854
    %v860 = vmul.f32 %v844, %v859
    %vm861 = vcmask 57344
    %862 = vst.msk [vmem:[#allocation3] sm:$0x1] %vm861, %v860
    // Predicated region
    $region22: #{tpu_custom_call.1} parent=1 // pred_check
      _
    $region23: #{tpu_custom_call.1} parent=1 // pred_check_branch
      %864 = sbr.rel (0) target = $region25
    $region24: #{tpu_custom_call.1} parent=1 // pred_region
      %866 = vsyncadd [#allocation4], 0
      %s868 = sshll.u32 [#allocation3], 4
      %s869 = int_to_ptr.vmem [resolvable:$true] %s868
      %s870 = sshll.u32 %s5, 4
      %s871 = int_to_ptr.hbm [resolvable:$true] %s870
      %873 = dma.vmem_to_hbm [thread:$0]  %s869, 16, %s871, [#allocation4]
    $region25: #{tpu_custom_call.1} parent=1 // pred_fallthru
      _
    // Predicated region
    $region26: #{tpu_custom_call.1} parent=1 // pred_check
      _
    $region27: #{tpu_custom_call.1} parent=1 // pred_check_branch
      %875 = sbr.rel (0) target = $region29
    $region28: #{tpu_custom_call.1} parent=1 // pred_region
      %877 = dma.done [#allocation4], 16
    $region29: #{tpu_custom_call.1} parent=1 // pred_fallthru
      _
    %878 = vsyncpa [#allocation4], 1

</llo_original>
